<compile_context>
chip_gen: v7x
topology: tpu7x:2x2x1
jax: 0.10.0
libtpu: 0.0.40
codegen_flags: <defaults>
</compile_context>

<pallas_src>
import functools
import math

import jax
import jax.numpy as jnp
from jax.experimental import pallas as pl
from jax.experimental.pallas import tpu as pltpu


def _cos_m_theta(m, c):
    # self.mlambda[m] from the reference module.
    if m == 0:
        return jnp.ones_like(c)
    if m == 1:
        return c
    if m == 2:
        return 2.0 * c ** 2 - 1.0
    if m == 3:
        return 4.0 * c ** 3 - 3.0 * c
    if m == 4:
        return 8.0 * c ** 4 - 8.0 * c ** 2 + 1.0
    if m == 5:
        return 16.0 * c ** 5 - 20.0 * c ** 3 + 5.0 * c
    raise ValueError("m must be in [0, 5]")


def _sphere_kernel(inv_lamb_ref, x_ref, wt_ref, invw_ref, xnorm_ref, label_ref,
                   out_ref, *, m, tile_c, thresholds):
    j = pl.program_id(0)

    # --- cosine similarities: raw bf16 MXU matmul, norms folded in afterwards ---
    raw = jnp.dot(x_ref[...], wt_ref[...],
                  preferred_element_type=jnp.float32)            # (B, TILE_C) f32

    xnorm = xnorm_ref[...]                                       # (B, 1) f32
    inv_x = 1.0 / jnp.maximum(xnorm, 1e-12)                      # F.normalize eps
    cos_theta = raw * inv_x * invw_ref[...]                      # (B,1)*(1,TILE_C) bcast
    cos_theta = jnp.clip(cos_theta, -1.0, 1.0)

    # --- phi_theta = (-1)^k * cos(m*theta) - 2k, without any acos ---
    cos_m = _cos_m_theta(m, cos_theta)
    k = jnp.zeros(cos_theta.shape, dtype=jnp.int32)
    for t in thresholds:            # k = floor(m*acos(c)/3.14159265); cos monotone
        k = k + (cos_theta <= t).astype(jnp.int32)
    sign = (1 - 2 * (k & 1)).astype(jnp.float32)                 # (-1)^k
    phi_theta = sign * cos_m - 2.0 * k.astype(jnp.float32)

    # --- one-hot mix via jnp.where (no materialized one-hot) ---
    col = jax.lax.broadcasted_iota(jnp.int32, cos_theta.shape, 1) + j * tile_c
    is_target = col == label_ref[...]                            # (B,TILE_C) vs (B,1)

    inv_1p_lamb = inv_lamb_ref[0, 0]                             # 1/(1+lamb), SMEM scalar
    out = jnp.where(is_target,
                    cos_theta + (phi_theta - cos_theta) * inv_1p_lamb,
                    cos_theta)
    out_ref[...] = out * xnorm                                   # *= ||x||_2 per row


def sphere_product_forward(x, weight, label, *, iter_count=1, m=4, tile_c=512,
                           base=1000.0, gamma=0.12, power=1, lambda_min=5.0):
    """Stateless SphereProduct forward. `iter_count` is the (1-based) call count."""
    B, D = x.shape
    C, D2 = weight.shape
    assert D == D2

    # TODO(synk): the PyTorch module mutates self.iter / self.lamb in forward();
    # that state is kept host-side here (iter_count arg) and lamb enters the
    # kernel as a runtime SMEM scalar so changing it does not recompile.
    lamb = max(float(lambda_min), float(base) * (1.0 + gamma * iter_count) ** (-power))
    inv_1p_lamb = 1.0 / (1.0 + lamb)

    x32 = x.astype(jnp.float32)
    w32 = weight.astype(jnp.float32)

    # Row norms of x (full f32 precision); reused for F.normalize and the final scale.
    x_norm = jnp.sqrt(jnp.sum(x32 * x32, axis=1, keepdims=True))         # (B, 1)

    # Per-class inverse weight norms: one-time, parameter-style precompute.
    w_norm = jnp.sqrt(jnp.sum(w32 * w32, axis=1))                        # (C,)
    inv_w = (1.0 / jnp.maximum(w_norm, 1e-12)).astype(jnp.float32)

    # Lane-dense class tiling: TILE_C a multiple of 128, C padded up to a tile multiple.
    tile_c = max(128, (int(tile_c) // 128) * 128)
    c_ceil = ((C + 127) // 128) * 128
    tile_c = min(tile_c, c_ceil)
    c_pad = ((C + tile_c - 1) // tile_c) * tile_c
    n_tiles = c_pad // tile_c

    # bf16 MXU operands; weight pre-transposed to (D, C_pad) so the kernel does a
    # plain (B,D)@(D,TILE_C) contraction (no in-kernel transpose / XLU shuffles).
    x_bf = x32.astype(jnp.bfloat16)
    wt_bf = jnp.pad(jnp.transpose(w32), ((0, 0), (0, c_pad - C))).astype(jnp.bfloat16)
    inv_w_pad = jnp.pad(inv_w, (0, c_pad - C)).reshape(1, c_pad)

    inv_lamb_arr = jnp.array([[inv_1p_lamb]], dtype=jnp.float32)
    label_2d = label.astype(jnp.int32).reshape(B, 1)

    # k = floor(m*acos(c)/PI_APPROX)  <=>  #{i in 1..m : c <= cos(i*PI_APPROX/m)}.
    pi_approx = 3.14159265
    thresholds = tuple(math.cos(pi_approx * i / m) for i in range(1, m + 1)) if m > 0 else ()

    kernel = functools.partial(_sphere_kernel, m=m, tile_c=tile_c, thresholds=thresholds)

    grid_spec = pltpu.PrefetchScalarGridSpec(
        num_scalar_prefetch=0,
        grid=(n_tiles,),
        in_specs=[
            pl.BlockSpec((1, 1), lambda j: (0, 0),
                         memory_space=pltpu.MemorySpace.SMEM),    # 1/(1+lamb) scalar
            pl.BlockSpec((B, D), lambda j: (0, 0)),               # x (resident, bf16)
            pl.BlockSpec((D, tile_c), lambda j: (0, j)),          # W^T tile (streamed, bf16)
            pl.BlockSpec((1, tile_c), lambda j: (0, j)),          # 1/||w_c|| tile
            pl.BlockSpec((B, 1), lambda j: (0, 0)),               # ||x|| (resident)
            pl.BlockSpec((B, 1), lambda j: (0, 0)),               # label (resident)
        ],
        out_specs=pl.BlockSpec((B, tile_c), lambda j: (0, j)),
    )

    out_pad = pl.pallas_call(
        kernel,
        grid_spec=grid_spec,
        out_shape=jax.ShapeDtypeStruct((B, c_pad), jnp.float32),
        compiler_params=pltpu.CompilerParams(
            dimension_semantics=("parallel",),   # no cross-tile reduction -> megacore-safe
            vmem_limit_bytes=32 * 1024 * 1024,   # raise further for TILE_C >= 2k on v5e/v6e
        ),
    )(inv_lamb_arr, x_bf, wt_bf, inv_w_pad, x_norm, label_2d)

    return out_pad[:, :C]


def _sphere_product_reference(x, weight, label, *, iter_count=1, m=4,
                              base=1000.0, gamma=0.12, power=1, lambda_min=5.0):
    """Pure-JAX f32 reference mirroring the PyTorch forward."""
    lamb = max(float(lambda_min), float(base) * (1.0 + gamma * iter_count) ** (-power))
    eps = 1e-12
    x_n = x / jnp.maximum(jnp.linalg.norm(x, axis=1, keepdims=True), eps)
    w_n = weight / jnp.maximum(jnp.linalg.norm(weight, axis=1, keepdims=True), eps)
    cos_theta = jnp.clip(x_n @ w_n.T, -1.0, 1.0)
    mlambda = [
        lambda c: c ** 0, lambda c: c ** 1, lambda c: 2 * c ** 2 - 1,
        lambda c: 4 * c ** 3 - 3 * c, lambda c: 8 * c ** 4 - 8 * c ** 2 + 1,
        lambda c: 16 * c ** 5 - 20 * c ** 3 + 5 * c,
    ]
    cos_m_theta = mlambda[m](cos_theta)
    theta = jnp.arccos(cos_theta)
    k = jnp.floor(m * theta / 3.14159265)
    sign = 1.0 - 2.0 * jnp.mod(k, 2.0)                       # (-1)^k, integer-valued k
    phi_theta = sign * cos_m_theta - 2.0 * k
    one_hot = jax.nn.one_hot(label, weight.shape[0], dtype=cos_theta.dtype)
    out = one_hot * (phi_theta - cos_theta) / (1.0 + lamb) + cos_theta
    return out * jnp.linalg.norm(x, axis=1, keepdims=True)


if __name__ == "__main__":
    # Small shapes consistent with the module: batch=8, in_features=64, out_features=200
    # (200 classes -> padded to 256, two 128-wide class tiles exercise the grid).
    B, IN_F, OUT_F = 8, 64, 200
    key = jax.random.PRNGKey(0)
    k_x, k_w, k_l = jax.random.split(key, 3)

    x = jax.random.normal(k_x, (B, IN_F), dtype=jnp.float32)

    # Deterministic xavier_uniform_ init for weight (out_features, in_features).
    bound = math.sqrt(6.0 / (IN_F + OUT_F))
    weight = jax.random.uniform(k_w, (OUT_F, IN_F), dtype=jnp.float32,
                                minval=-bound, maxval=bound)

    label = jax.random.randint(k_l, (B,), 0, OUT_F, dtype=jnp.int32)

    out = sphere_product_forward(x, weight, label, iter_count=1, m=4, tile_c=128)
    out = jax.block_until_ready(out)

    ref = _sphere_product_reference(x, weight, label, iter_count=1, m=4)

    assert out.shape == (B, OUT_F)
    assert bool(jnp.all(jnp.isfinite(out)))
    assert float(jnp.max(jnp.abs(out - ref))) < 0.2   # bf16-MXU tolerance vs f32 reference
    print("KERNEL_OK")
</pallas_src>

<mosaic_0001>
module attributes {stable_mosaic.version = 11 : i64} {
  func.func @_sphere_kernel(%arg0: i32, %arg1: memref<1x1xf32, #tpu.memory_space<smem>>, %arg2: memref<8x64xbf16, #tpu.memory_space<vmem>>, %arg3: memref<64x128xbf16, #tpu.memory_space<vmem>>, %arg4: memref<1x128xf32, #tpu.memory_space<vmem>>, %arg5: memref<8x1xf32, #tpu.memory_space<vmem>>, %arg6: memref<8x1xi32, #tpu.memory_space<vmem>>, %arg7: memref<8x128xf32, #tpu.memory_space<vmem>>) attributes {dimension_semantics = [#tpu.dimension_semantics<parallel>], iteration_bounds = array<i64: 2>, scalar_prefetch = 0 : i64, scratch_operands = 0 : i64, tpu.core_type = #tpu.core_type<tc>, window_params = [{transform_indices = @transform_0, window_bounds = array<i64: 1, 1>}, {pipeline_mode = #tpu.pipeline_mode<synchronous>, transform_indices = @transform_1, window_bounds = array<i64: 8, 64>}, {transform_indices = @transform_2, window_bounds = array<i64: 64, 128>}, {transform_indices = @transform_3, window_bounds = array<i64: 1, 128>}, {pipeline_mode = #tpu.pipeline_mode<synchronous>, transform_indices = @transform_4, window_bounds = array<i64: 8, 1>}, {pipeline_mode = #tpu.pipeline_mode<synchronous>, transform_indices = @transform_5, window_bounds = array<i64: 8, 1>}, {transform_indices = @transform_6, window_bounds = array<i64: 8, 128>}]} {
    %c0 = arith.constant 0 : index
    %c0_0 = arith.constant 0 : index
    %0 = vector.load %arg2[%c0, %c0_0] : memref<8x64xbf16, #tpu.memory_space<vmem>>, vector<8x64xbf16>
    %c0_1 = arith.constant 0 : index
    %c0_2 = arith.constant 0 : index
    %1 = vector.load %arg3[%c0_1, %c0_2] : memref<64x128xbf16, #tpu.memory_space<vmem>>, vector<64x128xbf16>
    %cst = arith.constant dense<0.000000e+00> : vector<8x128xf32>
    %2 = tpu.matmul %0, %1, %cst {dimension_numbers = #tpu.dot_dimension_numbers<[1], [0], [0], [1], [0, 0, 1, 1], [], []>} : vector<8x64xbf16>, vector<64x128xbf16>, vector<8x128xf32> -> vector<8x128xf32>
    %c0_3 = arith.constant 0 : index
    %c0_4 = arith.constant 0 : index
    %3 = vector.load %arg5[%c0_3, %c0_4] : memref<8x1xf32, #tpu.memory_space<vmem>>, vector<8x1xf32>
    %cst_5 = arith.constant 9.99999996E-13 : f32
    %4 = vector.broadcast %cst_5 : f32 to vector<8x1xf32>
    %5 = arith.maximumf %3, %4 : vector<8x1xf32>
    %cst_6 = arith.constant 1.000000e+00 : f32
    %6 = vector.broadcast %cst_6 : f32 to vector<8x1xf32>
    %7 = arith.divf %6, %5 : vector<8x1xf32>
    %8 = vector.broadcast %7 : vector<8x1xf32> to vector<8x128xf32>
    %9 = arith.mulf %2, %8 : vector<8x128xf32>
    %c0_7 = arith.constant 0 : index
    %c0_8 = arith.constant 0 : index
    %10 = vector.load %arg4[%c0_7, %c0_8] : memref<1x128xf32, #tpu.memory_space<vmem>>, vector<1x128xf32>
    %11 = vector.broadcast %10 : vector<1x128xf32> to vector<8x128xf32>
    %12 = arith.mulf %9, %11 : vector<8x128xf32>
    %cst_9 = arith.constant -1.000000e+00 : f32
    %cst_10 = arith.constant 1.000000e+00 : f32
    %13 = vector.broadcast %cst_9 : f32 to vector<8x128xf32>
    %14 = arith.maximumf %13, %12 : vector<8x128xf32>
    %15 = vector.broadcast %cst_10 : f32 to vector<8x128xf32>
    %16 = arith.minimumf %15, %14 : vector<8x128xf32>
    %17 = arith.mulf %16, %16 : vector<8x128xf32>
    %18 = arith.mulf %17, %17 : vector<8x128xf32>
    %cst_11 = arith.constant 8.000000e+00 : f32
    %19 = vector.broadcast %cst_11 : f32 to vector<8x128xf32>
    %20 = arith.mulf %19, %18 : vector<8x128xf32>
    %21 = arith.mulf %16, %16 : vector<8x128xf32>
    %cst_12 = arith.constant 8.000000e+00 : f32
    %22 = vector.broadcast %cst_12 : f32 to vector<8x128xf32>
    %23 = arith.mulf %22, %21 : vector<8x128xf32>
    %24 = arith.subf %20, %23 : vector<8x128xf32>
    %cst_13 = arith.constant 1.000000e+00 : f32
    %25 = vector.broadcast %cst_13 : f32 to vector<8x128xf32>
    %26 = arith.addf %24, %25 : vector<8x128xf32>
    %c0_i32 = arith.constant 0 : i32
    %27 = vector.broadcast %c0_i32 : i32 to vector<8x128xi32>
    %cst_14 = arith.constant 0.707106769 : f32
    %28 = vector.broadcast %cst_14 : f32 to vector<8x128xf32>
    %29 = arith.cmpf ole, %16, %28 : vector<8x128xf32>
    %30 = arith.extui %29 : vector<8x128xi1> to vector<8x128xi32>
    %31 = arith.addi %27, %30 : vector<8x128xi32>
    %cst_15 = arith.constant 1.79489656E-9 : f32
    %32 = vector.broadcast %cst_15 : f32 to vector<8x128xf32>
    %33 = arith.cmpf ole, %16, %32 : vector<8x128xf32>
    %34 = arith.extui %33 : vector<8x128xi1> to vector<8x128xi32>
    %35 = arith.addi %31, %34 : vector<8x128xi32>
    %cst_16 = arith.constant -0.707106769 : f32
    %36 = vector.broadcast %cst_16 : f32 to vector<8x128xf32>
    %37 = arith.cmpf ole, %16, %36 : vector<8x128xf32>
    %38 = arith.extui %37 : vector<8x128xi1> to vector<8x128xi32>
    %39 = arith.addi %35, %38 : vector<8x128xi32>
    %cst_17 = arith.constant -1.000000e+00 : f32
    %40 = vector.broadcast %cst_17 : f32 to vector<8x128xf32>
    %41 = arith.cmpf ole, %16, %40 : vector<8x128xf32>
    %42 = arith.extui %41 : vector<8x128xi1> to vector<8x128xi32>
    %43 = arith.addi %39, %42 : vector<8x128xi32>
    %c1_i32 = arith.constant 1 : i32
    %44 = vector.broadcast %c1_i32 : i32 to vector<8x128xi32>
    %45 = arith.andi %43, %44 : vector<8x128xi32>
    %c2_i32 = arith.constant 2 : i32
    %46 = vector.broadcast %c2_i32 : i32 to vector<8x128xi32>
    %47 = arith.muli %46, %45 : vector<8x128xi32>
    %c1_i32_18 = arith.constant 1 : i32
    %48 = vector.broadcast %c1_i32_18 : i32 to vector<8x128xi32>
    %49 = arith.subi %48, %47 : vector<8x128xi32>
    %50 = arith.sitofp %49 : vector<8x128xi32> to vector<8x128xf32>
    %51 = arith.mulf %50, %26 : vector<8x128xf32>
    %52 = arith.sitofp %43 : vector<8x128xi32> to vector<8x128xf32>
    %cst_19 = arith.constant 2.000000e+00 : f32
    %53 = vector.broadcast %cst_19 : f32 to vector<8x128xf32>
    %54 = arith.mulf %53, %52 : vector<8x128xf32>
    %55 = arith.subf %51, %54 : vector<8x128xf32>
    %56 = tpu.iota {dimensions = array<i32: 1>} : vector<8x128xi32>
    %c128_i32 = arith.constant 128 : i32
    %57 = arith.muli %arg0, %c128_i32 : i32
    %58 = vector.broadcast %57 : i32 to vector<8x128xi32>
    %59 = arith.addi %56, %58 : vector<8x128xi32>
    %c0_20 = arith.constant 0 : index
    %c0_21 = arith.constant 0 : index
    %60 = vector.load %arg6[%c0_20, %c0_21] : memref<8x1xi32, #tpu.memory_space<vmem>>, vector<8x1xi32>
    %61 = vector.broadcast %60 : vector<8x1xi32> to vector<8x128xi32>
    %62 = arith.cmpi eq, %59, %61 : vector<8x128xi32>
    %c0_22 = arith.constant 0 : index
    %c0_23 = arith.constant 0 : index
    %63 = memref.load %arg1[%c0_22, %c0_23] : memref<1x1xf32, #tpu.memory_space<smem>>
    %64 = arith.subf %55, %16 : vector<8x128xf32>
    %65 = vector.broadcast %63 : f32 to vector<8x128xf32>
    %66 = arith.mulf %64, %65 : vector<8x128xf32>
    %67 = arith.addf %16, %66 : vector<8x128xf32>
    %68 = arith.select %62, %67, %16 : vector<8x128xi1>, vector<8x128xf32>
    %69 = vector.broadcast %3 : vector<8x1xf32> to vector<8x128xf32>
    %70 = arith.mulf %68, %69 : vector<8x128xf32>
    %c0_24 = arith.constant 0 : index
    %c0_25 = arith.constant 0 : index
    %71 = vector.load %arg7[%c0_24, %c0_25] : memref<8x128xf32, #tpu.memory_space<vmem>>, vector<8x128xf32>
    tpu.vector_store %arg7[%c0_24, %c0_25], %70 {strides = array<i32>} : memref<8x128xf32, #tpu.memory_space<vmem>>, vector<8x128xf32>,
    return
  }
  func.func @transform_0(%arg0: i32) -> (i32, i32) {
    %c0_i32 = arith.constant 0 : i32
    %c0_i32_0 = arith.constant 0 : i32
    %c0_i32_1 = arith.constant 0 : i32
    return %c0_i32, %c0_i32_0 : i32, i32
  }
  func.func @transform_1(%arg0: i32) -> (i32, i32) {
    %c0_i32 = arith.constant 0 : i32
    %c0_i32_0 = arith.constant 0 : i32
    %c0_i32_1 = arith.constant 0 : i32
    return %c0_i32, %c0_i32_0 : i32, i32
  }
  func.func @transform_2(%arg0: i32) -> (i32, i32) {
    %c0_i32 = arith.constant 0 : i32
    %c0_i32_0 = arith.constant 0 : i32
    return %c0_i32, %arg0 : i32, i32
  }
  func.func @transform_3(%arg0: i32) -> (i32, i32) {
    %c0_i32 = arith.constant 0 : i32
    %c0_i32_0 = arith.constant 0 : i32
    return %c0_i32, %arg0 : i32, i32
  }
  func.func @transform_4(%arg0: i32) -> (i32, i32) {
    %c0_i32 = arith.constant 0 : i32
    %c0_i32_0 = arith.constant 0 : i32
    %c0_i32_1 = arith.constant 0 : i32
    return %c0_i32, %c0_i32_0 : i32, i32
  }
  func.func @transform_5(%arg0: i32) -> (i32, i32) {
    %c0_i32 = arith.constant 0 : i32
    %c0_i32_0 = arith.constant 0 : i32
    %c0_i32_1 = arith.constant 0 : i32
    return %c0_i32, %c0_i32_0 : i32, i32
  }
  func.func @transform_6(%arg0: i32) -> (i32, i32) {
    %c0_i32 = arith.constant 0 : i32
    %c0_i32_0 = arith.constant 0 : i32
    return %c0_i32, %arg0 : i32, i32
  }
}

</mosaic_0001>

<llo_original>
// kernel: tpu_custom_call.1
$region0: #{tpu_custom_call.1}
  #allocation0 [shape = 'u32[]', space=smem, size = 0x4, offset = 0x4, fixed_abs, tag = 'smem constant byte address 0x4 - core index']
  #allocation1 [shape = 'u32[144,128]{1,0:T(1,128)}', space=vmem, size = 0x12000, scoped, tag = 'internal scratch']
  #allocation2 [shape = 'f32[1,1]{1,0:T(1,128)S(6)}', space=smem, size = 0x200, scoped, tag = 'scoped memory for tpu_custom_call.1']
  %s0 = inlined_call_operand.<no memory space> [shape: f32[1,1], index: 0, kind: input, shape index: {}]
  %s1 = inlined_call_operand.vmem [shape: bf16[8,64], index: 1, kind: input, shape index: {}]
  %s2 = inlined_call_operand.hbm [shape: bf16[64,256], index: 2, kind: input, shape index: {}]
  %s3 = inlined_call_operand.vmem [shape: f32[1,256], index: 3, kind: input, shape index: {}]
  %s4 = inlined_call_operand.vmem [shape: f32[8,1], index: 4, kind: input, shape index: {}]
  %s5 = inlined_call_operand.vmem [shape: s32[8,1], index: 5, kind: input, shape index: {}]
  %s6 = inlined_call_operand.hbm [shape: f32[8,256], index: 6, kind: output, shape index: {}]
  %s7 = sld [smem:[#allocation0]]
  $region61: #{tpu_custom_call.1} parent=0
    _
  %s9 = ssub.s32 1, %s7
  %s10 = scalar_select 0, %s9, %s7
  %11 = sst [smem:[#allocation2]] %s0
  $region1: #{tpu_custom_call.1} parent=0
    #allocation3 [shape = 'u8[32768]{0}', space=vmem, size = 0x8000, scoped, tag = 'input window, operand 2']
    #allocation4 [shape = 's32[2]{0}', space=sflag, size = 0x8, scoped, tag = 'scoped memory for tpu_custom_call.1']
    #allocation5 [shape = 's32[2]{0}', space=sflag, size = 0x8, scoped, tag = 'scoped memory for tpu_custom_call.1']
    #allocation6 [shape = 'u8[8192]{0}', space=vmem, size = 0x2000, scoped, tag = 'output window, operand 0']
    %12 = vsyncpa [#allocation4], 0
    %s13 = scalar_lea.sflag [#allocation4], 1
    %14 = vsyncpa %s13, 0
    %15 = vsyncpa [#allocation5], 0
    %s16 = scalar_lea.sflag [#allocation5], 1
    %17 = vsyncpa %s16, 0
    loop: start=0, step=1, limit=4
    $region2: #{tpu_custom_call.1} parent=1 // loop_pre_header
      _
    $region3: #{tpu_custom_call.1} parent=1 // loop_header
      %s19 = sphi 0, %s23
      %p20 = scmp.ge.s32.totalorder %s19, 4
      %s27 = sphi 0, %s27
      %s29 = sphi 0, %s27
      %s30 = sphi 0, %s29
      %s44 = sphi 0, %s30
      %s48 = sphi 0, %s48
      %s50 = sphi 0, %s48
      %s51 = sphi 0, %s50
      %s65 = sphi 0, %s51
      %s71 = sphi 0, %s73
      %s74 = sphi 0, %s71
      %s75 = sphi 0, %s74
      %s91 = sphi 0, %s75
      %s97 = sphi 0, %s99
      %s100 = sphi 0, %s97
      %s101 = sphi 0, %s100
      %s117 = sphi 0, %s101
      %s121 = sphi 0, %s121
      %s123 = sphi 0, %s121
      %s124 = sphi 0, %s123
      %s138 = sphi 0, %s124
      %s142 = sphi 0, %s142
      %s144 = sphi 0, %s142
      %s145 = sphi 0, %s144
      %s159 = sphi 0, %s145
      %s165 = sphi 0, %s167
      %s168 = sphi 0, %s165
      %s169 = sphi 0, %s168
      %s185 = sphi 0, %s169
    $region4: #{tpu_custom_call.1} parent=1 // loop_header_branch
      %22 = sbr.rel (%p20) target = $region8
    $region5: #{tpu_custom_call.1} parent=1 // loop_body
      %s24 = ssub.s32 %s19, 1
      %s25 = ssub.s32 %s19, 2
      %s26 = sadd.s32 %s19, 1
      %s28 = sadd.s32 %s27, 1
      %p31 = scmp.eq.s32.totalorder %s19, 1
      %p32 = scmp.ne.s32.totalorder %s27, %s29
      %p33 = scmp.eq.s32.totalorder %s19, 0
      %p34 = por %p32, %p33
      %p35 = scmp.ne.s32.totalorder %s27, %s29
      %p36 = scmp.eq.s32.totalorder %s24, 1
      %p37 = por %p35, %p36
      %p38 = scmp.ne.s32.totalorder %s29, %s30
      %p39 = scmp.eq.s32.totalorder %s24, 0
      %p40 = por %p38, %p39
      %p41 = scmp.ne.s32.totalorder %s29, %s30
      %p42 = scmp.eq.s32.totalorder %s25, 1
      %p43 = por %p41, %p42
      %p45 = scmp.ne.s32.totalorder %s30, %s44
      %p46 = scmp.eq.s32.totalorder %s25, 0
      %p47 = por %p45, %p46
      %s49 = sadd.s32 %s48, 1
      %p52 = scmp.eq.s32.totalorder %s19, 1
      %p53 = scmp.ne.s32.totalorder %s48, %s50
      %p54 = scmp.eq.s32.totalorder %s19, 0
      %p55 = por %p53, %p54
      %p56 = scmp.ne.s32.totalorder %s48, %s50
      %p57 = scmp.eq.s32.totalorder %s24, 1
      %p58 = por %p56, %p57
      %p59 = scmp.ne.s32.totalorder %s50, %s51
      %p60 = scmp.eq.s32.totalorder %s24, 0
      %p61 = por %p59, %p60
      %p62 = scmp.ne.s32.totalorder %s50, %s51
      %p63 = scmp.eq.s32.totalorder %s25, 1
      %p64 = por %p62, %p63
      %p66 = scmp.ne.s32.totalorder %s51, %s65
      %p67 = scmp.eq.s32.totalorder %s25, 0
      %p68 = por %p66, %p67
      %s69 = ssub.s32 %s19, %s26
      %p70 = scmp.eq.s32.totalorder %s69, 0
      %s72 = sadd.s32 %s71, 1
      %s73 = scalar_select %p70, %s71, %s72
      %p76 = pneg %p70
      %p77 = scmp.eq.s32.totalorder %s19, 1
      %p78 = por %p76, %p77
      %p79 = scmp.ne.s32.totalorder %s71, %s74
      %p80 = scmp.eq.s32.totalorder %s19, 0
      %p81 = por %p79, %p80
      %p82 = scmp.ne.s32.totalorder %s71, %s74
      %p83 = scmp.eq.s32.totalorder %s24, 1
      %p84 = por %p82, %p83
      %p85 = scmp.ne.s32.totalorder %s74, %s75
      %p86 = scmp.eq.s32.totalorder %s24, 0
      %p87 = por %p85, %p86
      %p88 = scmp.ne.s32.totalorder %s74, %s75
      %p89 = scmp.eq.s32.totalorder %s25, 1
      %p90 = por %p88, %p89
      %p92 = scmp.ne.s32.totalorder %s75, %s91
      %p93 = scmp.eq.s32.totalorder %s25, 0
      %p94 = por %p92, %p93
      %s95 = ssub.s32 %s19, %s26
      %p96 = scmp.eq.s32.totalorder %s95, 0
      %s98 = sadd.s32 %s97, 1
      %s99 = scalar_select %p96, %s97, %s98
      %p102 = pneg %p96
      %p103 = scmp.eq.s32.totalorder %s19, 1
      %p104 = por %p102, %p103
      %p105 = scmp.ne.s32.totalorder %s97, %s100
      %p106 = scmp.eq.s32.totalorder %s19, 0
      %p107 = por %p105, %p106
      %p108 = scmp.ne.s32.totalorder %s97, %s100
      %p109 = scmp.eq.s32.totalorder %s24, 1
      %p110 = por %p108, %p109
      %p111 = scmp.ne.s32.totalorder %s100, %s101
      %p112 = scmp.eq.s32.totalorder %s24, 0
      %p113 = por %p111, %p112
      %p114 = scmp.ne.s32.totalorder %s100, %s101
      %p115 = scmp.eq.s32.totalorder %s25, 1
      %p116 = por %p114, %p115
      %p118 = scmp.ne.s32.totalorder %s101, %s117
      %p119 = scmp.eq.s32.totalorder %s25, 0
      %p120 = por %p118, %p119
      %s122 = sadd.s32 %s121, 1
      %p125 = scmp.eq.s32.totalorder %s19, 1
      %p126 = scmp.ne.s32.totalorder %s121, %s123
      %p127 = scmp.eq.s32.totalorder %s19, 0
      %p128 = por %p126, %p127
      %p129 = scmp.ne.s32.totalorder %s121, %s123
      %p130 = scmp.eq.s32.totalorder %s24, 1
      %p131 = por %p129, %p130
      %p132 = scmp.ne.s32.totalorder %s123, %s124
      %p133 = scmp.eq.s32.totalorder %s24, 0
      %p134 = por %p132, %p133
      %p135 = scmp.ne.s32.totalorder %s123, %s124
      %p136 = scmp.eq.s32.totalorder %s25, 1
      %p137 = por %p135, %p136
      %p139 = scmp.ne.s32.totalorder %s124, %s138
      %p140 = scmp.eq.s32.totalorder %s25, 0
      %p141 = por %p139, %p140
      %s143 = sadd.s32 %s142, 1
      %p146 = scmp.eq.s32.totalorder %s19, 1
      %p147 = scmp.ne.s32.totalorder %s142, %s144
      %p148 = scmp.eq.s32.totalorder %s19, 0
      %p149 = por %p147, %p148
      %p150 = scmp.ne.s32.totalorder %s142, %s144
      %p151 = scmp.eq.s32.totalorder %s24, 1
      %p152 = por %p150, %p151
      %p153 = scmp.ne.s32.totalorder %s144, %s145
      %p154 = scmp.eq.s32.totalorder %s24, 0
      %p155 = por %p153, %p154
      %p156 = scmp.ne.s32.totalorder %s144, %s145
      %p157 = scmp.eq.s32.totalorder %s25, 1
      %p158 = por %p156, %p157
      %p160 = scmp.ne.s32.totalorder %s145, %s159
      %p161 = scmp.eq.s32.totalorder %s25, 0
      %p162 = por %p160, %p161
      %s163 = ssub.s32 %s19, %s26
      %p164 = scmp.eq.s32.totalorder %s163, 0
      %s166 = sadd.s32 %s165, 1
      %s167 = scalar_select %p164, %s165, %s166
      %p170 = pneg %p164
      %p171 = scmp.eq.s32.totalorder %s19, 1
      %p172 = por %p170, %p171
      %p173 = scmp.ne.s32.totalorder %s165, %s168
      %p174 = scmp.eq.s32.totalorder %s19, 0
      %p175 = por %p173, %p174
      %p176 = scmp.ne.s32.totalorder %s165, %s168
      %p177 = scmp.eq.s32.totalorder %s24, 1
      %p178 = por %p176, %p177
      %p179 = scmp.ne.s32.totalorder %s168, %s169
      %p180 = scmp.eq.s32.totalorder %s24, 0
      %p181 = por %p179, %p180
      %p182 = scmp.ne.s32.totalorder %s168, %s169
      %p183 = scmp.eq.s32.totalorder %s25, 1
      %p184 = por %p182, %p183
      %p186 = scmp.ne.s32.totalorder %s169, %s185
      %p187 = scmp.eq.s32.totalorder %s25, 0
      %p188 = por %p186, %p187
      %p189 = scmp.le.s32.totalorder 1, %s19
      %p190 = scmp.lt.s32.totalorder %s19, 3
      %p191 = pnand %p189, %p190
      %p192 = pneg %p191
      // Predicated region
      $region9: #{tpu_custom_call.1} parent=5 // pred_check
        _
      $region10: #{tpu_custom_call.1} parent=5 // pred_check_branch
        %194 = sbr.rel (%p191) target = $region12
      $region11: #{tpu_custom_call.1} parent=5 // pred_region
        %s195 = ssub.s32 %s19, 1
        // Predicated region
        $region13: #{tpu_custom_call.1} parent=11 // pred_check
          %p196 = pneg %p40
        $region14: #{tpu_custom_call.1} parent=11 // pred_check_branch
          %198 = sbr.rel (%p196) target = $region16
        $region15: #{tpu_custom_call.1} parent=11 // pred_region
          _
        $region16: #{tpu_custom_call.1} parent=11 // pred_fallthru
          _
        // Predicated region
        $region17: #{tpu_custom_call.1} parent=11 // pred_check
          %p199 = pneg %p61
        $region18: #{tpu_custom_call.1} parent=11 // pred_check_branch
          %201 = sbr.rel (%p199) target = $region20
        $region19: #{tpu_custom_call.1} parent=11 // pred_region
          _
        $region20: #{tpu_custom_call.1} parent=11 // pred_fallthru
          _
        // Predicated region
        $region21: #{tpu_custom_call.1} parent=11 // pred_check
          %p202 = pneg %p134
        $region22: #{tpu_custom_call.1} parent=11 // pred_check_branch
          %204 = sbr.rel (%p202) target = $region24
        $region23: #{tpu_custom_call.1} parent=11 // pred_region
          _
        $region24: #{tpu_custom_call.1} parent=11 // pred_fallthru
          _
        // Predicated region
        $region25: #{tpu_custom_call.1} parent=11 // pred_check
          %p205 = pneg %p155
        $region26: #{tpu_custom_call.1} parent=11 // pred_check_branch
          %207 = sbr.rel (%p205) target = $region28
        $region27: #{tpu_custom_call.1} parent=11 // pred_region
          _
        $region28: #{tpu_custom_call.1} parent=11 // pred_fallthru
          _
      $region12: #{tpu_custom_call.1} parent=5 // pred_fallthru
        _
      %p208 = scmp.lt.s32.totalorder %s19, 2
      // Predicated region
      $region29: #{tpu_custom_call.1} parent=5 // pred_check
        %p209 = pneg %p208
      $region30: #{tpu_custom_call.1} parent=5 // pred_check_branch
        %211 = sbr.rel (%p209) target = $region32
      $region31: #{tpu_custom_call.1} parent=5 // pred_region
        // Predicated region
        $region33: #{tpu_custom_call.1} parent=31 // pred_check
          %p212 = pneg %p81
        $region34: #{tpu_custom_call.1} parent=31 // pred_check_branch
          %214 = sbr.rel (%p212) target = $region36
        $region35: #{tpu_custom_call.1} parent=31 // pred_region
          %s215 = sand.u32 %s71, 1
          %s216 = scalar_lea.sflag [#allocation4], %s215
          %s217 = sand.u32 %s71, 1
          %s218 = smul.addr %s217, 32
          %s219 = scalar_lea.vmem [#allocation3], %s218
          %s221 = ssub.s32 512, 512
          %222 = vsyncadd %s216, %s221
          %s223 = smul.addr %s19, 64
          %s224 = scalar_lea.hbm %s2, %s223
          %s225 = sshll.u32 %s219, 4
          %s226 = int_to_ptr.vmem [resolvable:$true] %s225
          %231 = dma.hbm_to_vmem [thread:$0]  %s224, 512, %s226, %s216, 128, 64, 4
        $region36: #{tpu_custom_call.1} parent=31 // pred_fallthru
          _
        // Predicated region
        $region37: #{tpu_custom_call.1} parent=31 // pred_check
          %p232 = pneg %p107
        $region38: #{tpu_custom_call.1} parent=31 // pred_check_branch
          %234 = sbr.rel (%p232) target = $region40
        $region39: #{tpu_custom_call.1} parent=31 // pred_region
          %p235 = scmp.lt.s32.totalorder %s19, 1
          %s236 = scalar_select %p235, %s19, 1
          %s237 = scalar_lea.vmem %s3, %s236
        $region40: #{tpu_custom_call.1} parent=31 // pred_fallthru
          _
      $region32: #{tpu_custom_call.1} parent=5 // pred_fallthru
        _
      %p238 = scmp.le.s32.totalorder 1, %s19
      %p239 = scmp.lt.s32.totalorder %s19, 3
      %p240 = pnand %p238, %p239
      %p241 = pneg %p240
      // Predicated region
      $region41: #{tpu_custom_call.1} parent=5 // pred_check
        _
      $region42: #{tpu_custom_call.1} parent=5 // pred_check_branch
        %243 = sbr.rel (%p240) target = $region44
      $region43: #{tpu_custom_call.1} parent=5 // pred_region
        %s244 = ssub.s32 %s19, 1
        %s245 = sand.u32 %s74, 1
        %s246 = scalar_lea.sflag [#allocation4], %s245
        %s247 = sand.u32 %s74, 1
        %s248 = smul.addr %s247, 32
        %s249 = scalar_lea.vmem [#allocation3], %s248
        // Predicated region
        $region45: #{tpu_custom_call.1} parent=43 // pred_check
          %p250 = pneg %p87
        $region46: #{tpu_custom_call.1} parent=43 // pred_check_branch
          %252 = sbr.rel (%p250) target = $region48
        $region47: #{tpu_custom_call.1} parent=43 // pred_region
          %253 = dma.done %s246, 512
        $region48: #{tpu_custom_call.1} parent=43 // pred_fallthru
          _
        %p254 = pneg %p40
        %p255 = pneg %p37
        %p256 = pneg %p61
        %p257 = pneg %p58
        %s258 = sand.u32 %s74, 1
        %s259 = scalar_lea.sflag [#allocation4], %s258
        %s260 = sand.u32 %s74, 1
        %s261 = smul.addr %s260, 32
        %s262 = scalar_lea.vmem [#allocation3], %s261
        %p263 = pneg %p87
        %p264 = pneg %p84
        %p265 = scmp.lt.s32.totalorder %s24, 1
        %s266 = scalar_select %p265, %s24, 1
        %s267 = scalar_lea.vmem %s3, %s266
        %p268 = pneg %p113
        %p269 = pneg %p110
        %p270 = pneg %p134
        %p271 = pneg %p131
        %p272 = pneg %p155
        %p273 = pneg %p152
        %p274 = pneg %p181
        %p275 = pneg %p178
        %s276 = sand.u32 %s168, 1
        %s277 = scalar_lea.sflag [#allocation5], %s276
        %s278 = sand.u32 %s168, 1
        %s279 = smul.addr %s278, 8
        %s280 = scalar_lea.vmem [#allocation6], %s279
        %p281 = scmp.lt.s32.totalorder %s24, 1
        %s282 = scalar_select %p281, %s24, 1
        %s283 = scalar_lea.vmem %s3, %s282
        %v285 = vld [vmem:[%s1] sm:$0xf]
        %v286 = vld [vmem:[%s249] sm:$0xf]
        %v287 = vld [vmem:[%s249 + $0x4] sm:$0xf]
        %v288 = vld [vmem:[%s249 + $0x8] sm:$0xf]
        %v289 = vld [vmem:[%s249 + $0xc] sm:$0xf]
        %v290 = vld [vmem:[%s249 + $0x10] sm:$0xf]
        %v291 = vld [vmem:[%s249 + $0x14] sm:$0xf]
        %v292 = vld [vmem:[%s249 + $0x18] sm:$0xf]
        %v293 = vld [vmem:[%s249 + $0x1c] sm:$0xf]
        %v302 = vunpack.c.l.b16 %v286
        %v303 = vunpack.c.l.b16 %v287
        %v304 = vunpack.c.l.b16 %v288
        %v305 = vunpack.c.l.b16 %v289
        %v306 = vunpack.c.l.b16 %v290
        %v307 = vunpack.c.l.b16 %v291
        %v308 = vunpack.c.l.b16 %v292
        %v309 = vunpack.c.l.b16 %v293
        %v310 = vpack.c.b16 %v303, %v302
        %v311 = vpack.c.b16 %v305, %v304
        %v312 = vpack.c.b16 %v307, %v306
        %v313 = vpack.c.b16 %v309, %v308
        %vm318 = vcmask 523264
        %v320 = vsel %vm318, %v285, 0
        %322 = vmatprep.subr.bf16.mxu0 0
        %323 = vmatpush1.bf16.msra.mxu0 %v310
        %324 = vmatprep.subr.bf16.mxu0 0
        %325 = vmatpush1.bf16.msra.mxu0 %v311
        %326 = vmatprep.subr.bf16.mxu0 0
        %327 = vmatpush1.bf16.msra.mxu0 %v312
        %328 = vmatprep.subr.bf16.mxu0 0
        %329 = vmatpush1.bf16.msra.mxu0 %v313
        %330 = vmatprep.subr.bf16.mxu0 0
        %331 = vmatpush1.bf16.msra.mxu0 0
        %332 = vmatprep.subr.bf16.mxu0 0
        %333 = vmatpush1.bf16.msra.mxu0 0
        %334 = vmatprep.subr.bf16.mxu0 0
        %335 = vmatpush1.bf16.msra.mxu0 0
        %336 = vmatprep.subr.bf16.mxu0 0
        %337 = vmatpush1.bf16.msra.mxu0 0
        %338 = vmatprep.subr.bf16.mxu0 0
        %339 = vmatpush1.bf16.msra.mxu0 0
        %340 = vmatprep.subr.bf16.mxu0 0
        %341 = vmatpush1.bf16.msra.mxu0 0
        %342 = vmatprep.subr.bf16.mxu0 0
        %343 = vmatpush1.bf16.msra.mxu0 0
        %344 = vmatprep.subr.bf16.mxu0 0
        %345 = vmatpush1.bf16.msra.mxu0 0
        %346 = vmatprep.subr.bf16.mxu0 0
        %347 = vmatpush1.bf16.msra.mxu0 0
        %348 = vmatprep.subr.bf16.mxu0 0
        %349 = vmatpush1.bf16.msra.mxu0 0
        %350 = vmatprep.subr.bf16.mxu0 0
        %351 = vmatpush1.bf16.msra.mxu0 0
        %352 = vmatprep.subr.bf16.mxu0 0
        %353 = vmatpush1.bf16.msra.mxu0 0
        %354 = vmatprep.mubr.bf16.mxu0 0
        %355 = vmatmul.mubr.bf16.gmra.mrb[0].mxu0 %v320
        %v356 = vpop.f32.mrb[0].mxu0
        %v357 = vadd.f32 0.0, %v356
        %v358 = vpop.f32.mrb[0].mxu0
        %v359 = vpop.f32.mrb[0].mxu0
        %v360 = vpop.f32.mrb[0].mxu0
        %361 = vdwg.mxu0
        %v362 = vld [vmem:[%s4] sm:$0xff]
        %v363 = vmax.f32 %v362, 1e-12
        %v364 = vrcp.pop %v363
        %v365 = vmul.f32 1.0, %v364
        %367 = vset.pattern.permute.xlu0 0
        %368 = vperm.xlu0 %367, %v365
        %v369 = vpop.permute.xlu0 %368
        %v371 = vmul.f32 %v357, %v369
        %v372 = vld [vmem:[%s283] sm:$0x1]
        %v374 = vlaneseq
        %v375 = vshrl.u32 %v374, 7
        %v376 = vsub.s32 0, %v375
        %v377 = vrot.slane %v372, %v376
        %v379 = vmul.f32 %v371, %v377
        %v380 = vmax.f32 %v379, -1.0
        %v381 = vmin.f32 %v380, 1.0
        %v382 = vmul.f32 %v381, %v381
        %v383 = vmul.f32 %v382, %v382
        %v384 = vmul.f32 %v383, 8.0
        %v385 = vmul.f32 %v382, 8.0
        %v386 = vsub.f32 %v384, %v385
        %v387 = vadd.f32 %v386, 1.0
        %vm388 = vcmp.le.f32.partialorder %v381, 0.70710677
        %v389 = vsel %vm388, 1, 0
        %vm390 = vcmp.le.f32.partialorder %v381, 1.7948966e-09
        %v391 = vsel %vm390, 1, 0
        %v392 = vadd.s32 %v389, %v391
        %vm393 = vcmp.le.f32.partialorder %v381, -0.70710677
        %v394 = vsel %vm393, 1, 0
        %v395 = vadd.s32 %v392, %v394
        %vm396 = vcmp.le.f32.partialorder %v381, -1.0
        %v397 = vsel %vm396, 1, 0
        %v398 = vadd.s32 %v395, %v397
        %v399 = vand.u32 %v398, 1
        %v400 = vmul.u32 %v399, 2
        %v401 = vsub.s32 1, %v400
        %v402 = vcvt.s32.f32 %v401
        %v403 = vmul.f32 %v402, %v387
        %v404 = vcvt.s32.f32 %v398
        %v405 = vmul.f32 %v404, 2.0
        %v406 = vsub.f32 %v403, %v405
        %v407 = vlaneseq
        %v408 = vand.u32 %v407, 127
        %s409 = smul.u32 %s24, 128
        %v410 = vstv %s409
        %v411 = vadd.s32 %v408, %v410
        %v412 = vld [vmem:[%s5] sm:$0xff]
        %413 = vset.pattern.permute.xlu0 0
        %414 = vperm.xlu0 %413, %v412
        %v415 = vpop.permute.xlu0 %414
        %vm416 = vcmp.eq.s32.totalorder %v411, %v415
        %s417 = sld [smem:[#allocation2]]
        %v418 = vsub.f32 %v406, %v381
        %v419 = vstv %s417
        %v420 = vmul.f32 %v418, %v419
        %v421 = vadd.f32 %v381, %v420
        %v422 = vsel %vm416, %v421, %v381
        %424 = vset.pattern.permute.xlu0 0
        %425 = vperm.xlu0 %424, %v362
        %v426 = vpop.permute.xlu0 %425
        %v428 = vmul.f32 %v422, %v426
        %429 = vst [vmem:[%s280] sm:$0xff] %v428
        %s430 = sand.u32 %s168, 1
        %s431 = scalar_lea.sflag [#allocation5], %s430
        %s432 = sand.u32 %s168, 1
        %s433 = smul.addr %s432, 8
        %s434 = scalar_lea.vmem [#allocation6], %s433
        // Predicated region
        $region49: #{tpu_custom_call.1} parent=43 // pred_check
          %p435 = pneg %p178
        $region50: #{tpu_custom_call.1} parent=43 // pred_check_branch
          %437 = sbr.rel (%p435) target = $region52
        $region51: #{tpu_custom_call.1} parent=43 // pred_region
          %s439 = ssub.s32 128, 128
          %440 = vsyncadd %s431, %s439
          %s441 = smul.addr %s24, 128
          %s442 = scalar_lea.hbm %s6, %s441
          %s444 = sshll.u32 %s434, 4
          %s445 = int_to_ptr.vmem [resolvable:$true] %s444
          %447 = dma.vmem_to_hbm [thread:$0]  %s445, 128, %s442, %s431
        $region52: #{tpu_custom_call.1} parent=43 // pred_fallthru
          _
      $region44: #{tpu_custom_call.1} parent=5 // pred_fallthru
        _
      %p448 = scmp.le.s32.totalorder 2, %s19
      // Predicated region
      $region53: #{tpu_custom_call.1} parent=5 // pred_check
        %p449 = pneg %p448
      $region54: #{tpu_custom_call.1} parent=5 // pred_check_branch
        %451 = sbr.rel (%p449) target = $region56
      $region55: #{tpu_custom_call.1} parent=5 // pred_region
        %s452 = ssub.s32 %s19, 2
        // Predicated region
        $region57: #{tpu_custom_call.1} parent=55 // pred_check
          %p453 = pneg %p184
        $region58: #{tpu_custom_call.1} parent=55 // pred_check_branch
          %455 = sbr.rel (%p453) target = $region60
        $region59: #{tpu_custom_call.1} parent=55 // pred_region
          %s456 = sand.u32 %s169, 1
          %s457 = scalar_lea.sflag [#allocation5], %s456
          %s458 = sand.u32 %s169, 1
          %s459 = smul.addr %s458, 8
          %s460 = scalar_lea.vmem [#allocation6], %s459
          %461 = dma.done %s457, 128
        $region60: #{tpu_custom_call.1} parent=55 // pred_fallthru
          _
      $region56: #{tpu_custom_call.1} parent=5 // pred_fallthru
        _
    $region6: #{tpu_custom_call.1} parent=1 // loop_footer
      %s23 = sadd.s32 1, %s19
    $region7: #{tpu_custom_call.1} parent=1 // loop_footer_branch
      %18 = sbr.rel target = $region3
    $region8: #{tpu_custom_call.1} parent=1 // loop_exit
      _
    %462 = vsyncpa [#allocation4], 1
    %s463 = scalar_lea.sflag [#allocation4], 1
    %464 = vsyncpa %s463, 1
    %465 = vsyncpa [#allocation5], 1
    %s466 = scalar_lea.sflag [#allocation5], 1
    %467 = vsyncpa %s466, 1

</llo_original>
